<compile_context>
chip_gen: v7x
topology: tpu7x:2x2x1
jax: 0.10.0
libtpu: 0.0.40
codegen_flags: <defaults>
</compile_context>

<pallas_src>
import functools

import jax
import jax.numpy as jnp
from jax.experimental import pallas as pl
from jax.experimental.pallas import tpu as pltpu

NEG_BIG = -9.0e15  # the -9000000000000000.0 literal in the PyTorch code


def _elu(v):
    # exp(v) - 1 (instead of expm1) to guarantee Mosaic lowering; ~1e-7 abs diff.
    return jnp.where(v > 0.0, v, jnp.exp(v) - 1.0)


def _row_tile(n):
    """Largest row tile (multiple of 8, <= 512) dividing n; else the full array."""
    if n <= 512:
        return n
    for tm in (512, 256, 128, 64, 32, 16, 8):
        if n % tm == 0:
            return tm
    return n


# ------------------------------ kernel bodies --------------------------------

def _proj_kernel(x_ref, w_ref, wh_ref):
    # wh_all = x @ [W_0 | ... | W_{H-1} | 0-pad]: every per-head projection in
    # one lane-dense GEMM.
    wh_ref[...] = jnp.dot(x_ref[...], w_ref[...],
                          preferred_element_type=jnp.float32)


def _neighbor_mean(adj_mask, values, n_total):
    """softmax(where(adj>0, e, -9e15), dim=1) @ values for row-constant e.

    attn[i,:] = adj_mask[i,:]/deg_i, or uniform 1/N when deg_i == 0, so
    attn @ values == (adj_mask @ values) * (1/deg)  (column mean as fallback).
    Exact vs the reference unless |e| ever approaches 9e15.
    """
    m = adj_mask.astype(jnp.float32)                      # 0/1 exact in bf16
    deg = jnp.sum(m, axis=1, keepdims=True)               # (TM, 1)
    has_nbr = deg > 0.0
    # TODO(synk): pl.reciprocal(..., approx=True) (EUP) is available once the
    # 1e-4 tolerance is relaxed; exact reciprocal kept for bit-safety here.
    inv = jnp.where(has_nbr, pl.reciprocal(jnp.maximum(deg, 1.0)),
                    jnp.float32(1.0 / n_total))
    agg = jnp.dot(m, values, preferred_element_type=jnp.float32)   # (TM, D)
    col_sum = jnp.sum(values, axis=0, keepdims=True)               # deg==0 fallback
    return jnp.where(has_nbr, agg, col_sum) * inv


def _heads_kernel(adj_ref, wh_ref, wout_ref, who_ref, *, n_total):
    # One shared aggregation for all H heads + fused concat/output projection.
    # TODO(synk): nn.Dropout (input / attention / head outputs) is identity in
    # eval mode; no stochastic dropout is applied.
    h_prime = _neighbor_mean(adj_ref[...], wh_ref[...], n_total)   # (TM, hd_pad)
    heads_out = _elu(h_prime)                   # zero-padded cols stay exactly 0
    who_ref[...] = jnp.dot(heads_out, wout_ref[...],
                           preferred_element_type=jnp.float32)


def _out_kernel(adj_ref, mask_ref, who_ref, out_ref, *, n_total):
    # Output attention head (concat=False) + F.elu + node mask + log_softmax.
    h_prime = _neighbor_mean(adj_ref[...], who_ref[...], n_total)  # (TM, nclass)
    y = mask_ref[...] * _elu(h_prime)
    y_max = jnp.max(y, axis=1, keepdims=True)
    y_sh = y - y_max
    lse = jnp.log(jnp.sum(jnp.exp(y_sh), axis=1, keepdims=True))
    out_ref[...] = (y_sh - lse).astype(out_ref.dtype)


# --------------------------------- wrapper ------------------------------------

def gat_layer_forward(x, adj, mask, head_ws, head_as, w_out, a_out, *, alpha):
    """GATlayer forward (eval mode).

    head_as / a_out / alpha are accepted for interface parity but provably do
    not influence the output (transpose no-op -> uniform attention); their
    cancellation is verified against the full reference in __main__.
    """
    del head_as, a_out, alpha
    n, nfeat = x.shape
    nheads = len(head_ws)
    nhid = head_ws[0].shape[1]
    nclass = w_out.shape[1]

    hd = nheads * nhid
    hd_pad = max(128, ((hd + 127) // 128) * 128)      # lane-dense intermediates

    # One-time wrapper-side packing; zero padding flows through exactly
    # (elu(0) = 0, zero rows in W_out contribute 0).
    w_all = jnp.concatenate([w.astype(jnp.float32) for w in head_ws], axis=1)
    w_all = jnp.pad(w_all, ((0, 0), (0, hd_pad - hd)))                # (nfeat, hd_pad)
    w_out_pad = jnp.pad(w_out.astype(jnp.float32), ((0, hd_pad - hd), (0, 0)))

    # adj is only used as a 0/1 mask; stream bf16 (0.0/1.0 exact) -> half the bytes.
    adj_mask = (adj > 0.0).astype(jnp.bfloat16)
    mask = mask.astype(jnp.float32)
    x = x.astype(jnp.float32)

    tm = _row_tile(n)
    grid = (pl.cdiv(n, tm),)
    cparams = pltpu.CompilerParams(
        dimension_semantics=("parallel",),            # row tiles independent (v7x 2 TCs)
        vmem_limit_bytes=48 * 1024 * 1024)            # fits v7x's 64 MiB physical VMEM

    # ---- pass 0: all per-head W projections in one wide GEMM ----------------
    wh_all = pl.pallas_call(
        _proj_kernel,
        out_shape=jax.ShapeDtypeStruct((n, hd_pad), jnp.float32),
        grid=grid,
        in_specs=[pl.BlockSpec((tm, nfeat), lambda i: (i, 0)),
                  pl.BlockSpec((nfeat, hd_pad), lambda i: (0, 0))],
        out_specs=pl.BlockSpec((tm, hd_pad), lambda i: (i, 0)),
        compiler_params=cparams,
    )(x, w_all)

    # ---- pass 1: shared aggregation for all heads + output projection -------
    wh_o = pl.pallas_call(
        functools.partial(_heads_kernel, n_total=n),
        out_shape=jax.ShapeDtypeStruct((n, nclass), jnp.float32),
        grid=grid,
        in_specs=[pl.BlockSpec((tm, n), lambda i: (i, 0)),        # adj stream (pipelined)
                  pl.BlockSpec((n, hd_pad), lambda i: (0, 0)),    # full wh_all, resident
                  pl.BlockSpec((hd_pad, nclass), lambda i: (0, 0))],
        out_specs=pl.BlockSpec((tm, nclass), lambda i: (i, 0)),
        compiler_params=cparams,
        cost_estimate=pl.CostEstimate(
            flops=2 * n * n * hd_pad + 2 * n * hd_pad * nclass,
            transcendentals=n * hd_pad,
            bytes_accessed=adj_mask.size * 2 + (n * hd_pad + n * nclass) * 4),
    )(adj_mask, wh_all, w_out_pad)

    # ---- pass 2: output aggregation + elu + node mask + log_softmax ---------
    out = pl.pallas_call(
        functools.partial(_out_kernel, n_total=n),
        out_shape=jax.ShapeDtypeStruct((n, nclass), jnp.float32),
        grid=grid,
        in_specs=[pl.BlockSpec((tm, n), lambda i: (i, 0)),
                  pl.BlockSpec((tm, 1), lambda i: (i, 0)),
                  pl.BlockSpec((n, nclass), lambda i: (0, 0))],
        out_specs=pl.BlockSpec((tm, nclass), lambda i: (i, 0)),
        compiler_params=cparams,
        cost_estimate=pl.CostEstimate(
            flops=2 * n * n * nclass,
            transcendentals=2 * n * nclass,
            bytes_accessed=adj_mask.size * 2 + 3 * n * nclass * 4),
    )(adj_mask, mask, wh_o)
    return out


# ---------------------------- pure-JAX reference -----------------------------
def _gat_unit_ref(h_in, adj, W, a, alpha, concat):
    Wh = jnp.matmul(h_in, W)
    nout = W.shape[1]
    Wh1 = jnp.matmul(Wh, a[:nout, :])
    Wh2 = jnp.matmul(Wh, a[nout:, :])
    temp = jnp.swapaxes(Wh2, 1, -1)        # mirrors torch.transpose(Wh2, 1, -1)
    e = jax.nn.leaky_relu(Wh1 + temp, negative_slope=alpha)
    e = jnp.where(adj > 0, e, NEG_BIG * jnp.ones_like(e))
    attention = jax.nn.softmax(e, axis=1)
    h_prime = jnp.matmul(attention, Wh)
    return jax.nn.elu(h_prime) if concat else h_prime


def reference_forward(x, adj, mask, head_ws, head_as, w_out, a_out, alpha):
    h = jnp.concatenate(
        [_gat_unit_ref(x, adj, W, a, alpha, True)
         for W, a in zip(head_ws, head_as)], axis=1)
    h = jax.nn.elu(_gat_unit_ref(h, adj, w_out, a_out, alpha, False))
    h = mask * h
    return jax.nn.log_softmax(h, axis=1)


if __name__ == "__main__":
    N, nfeat, nhid, nclass, nheads = 16, 32, 16, 8, 4
    alpha = 0.2

    key = jax.random.PRNGKey(0)
    keys = jax.random.split(key, 16)

    x = jax.random.normal(keys[0], (N, nfeat), jnp.float32)
    edges = (jax.random.uniform(keys[1], (N, N)) > 0.6).astype(jnp.float32)
    adj = jnp.maximum(edges, jnp.eye(N, dtype=jnp.float32))     # self loops
    adj = adj.at[5, :].set(0.0)                                 # one isolated row
    mask = (jax.random.uniform(keys[2], (N, 1)) > 0.2).astype(jnp.float32)

    def xavier(k, shape, gain=1.414):
        limit = gain * jnp.sqrt(6.0 / (shape[0] + shape[1]))
        return jax.random.uniform(k, shape, jnp.float32, -limit, limit)

    head_ws = [xavier(keys[4 + 2 * h], (nfeat, nhid)) for h in range(nheads)]
    head_as = [xavier(keys[5 + 2 * h], (2 * nhid, 1)) for h in range(nheads)]
    w_out = xavier(keys[3], (nheads * nhid, nclass))
    a_out = xavier(keys[4 + 2 * nheads], (2 * nclass, 1))

    out = gat_layer_forward(x, adj, mask, head_ws, head_as, w_out, a_out,
                            alpha=alpha)
    out = jax.block_until_ready(out)

    ref = reference_forward(x, adj, mask, head_ws, head_as, w_out, a_out, alpha)
    assert out.shape == (N, nclass)
    max_err = jnp.max(jnp.abs(out - ref))
    assert jnp.allclose(out, ref, atol=1e-4, rtol=1e-4), (
        f"mismatch vs reference, max abs err = {max_err}")

    print("KERNEL_OK")
</pallas_src>

<mosaic_0001>
module attributes {stable_mosaic.version = 11 : i64} {
  func.func @_proj_kernel(%arg0: i32, %arg1: memref<16x32xf32, #tpu.memory_space<vmem>>, %arg2: memref<32x128xf32, #tpu.memory_space<vmem>>, %arg3: memref<16x128xf32, #tpu.memory_space<vmem>>) attributes {dimension_semantics = [#tpu.dimension_semantics<parallel>], iteration_bounds = array<i64: 1>, scalar_prefetch = 0 : i64, scratch_operands = 0 : i64, tpu.core_type = #tpu.core_type<tc>, window_params = [{transform_indices = @transform_0, window_bounds = array<i64: 16, 32>}, {pipeline_mode = #tpu.pipeline_mode<synchronous>, transform_indices = @transform_1, window_bounds = array<i64: 32, 128>}, {transform_indices = @transform_2, window_bounds = array<i64: 16, 128>}]} {
    %c0 = arith.constant 0 : index
    %c0_0 = arith.constant 0 : index
    %0 = vector.load %arg1[%c0, %c0_0] : memref<16x32xf32, #tpu.memory_space<vmem>>, vector<16x32xf32>
    %c0_1 = arith.constant 0 : index
    %c0_2 = arith.constant 0 : index
    %1 = vector.load %arg2[%c0_1, %c0_2] : memref<32x128xf32, #tpu.memory_space<vmem>>, vector<32x128xf32>
    %cst = arith.constant dense<0.000000e+00> : vector<16x128xf32>
    %2 = tpu.matmul %0, %1, %cst {dimension_numbers = #tpu.dot_dimension_numbers<[1], [0], [0], [1], [0, 0, 1, 1], [], []>} : vector<16x32xf32>, vector<32x128xf32>, vector<16x128xf32> -> vector<16x128xf32>
    %c0_3 = arith.constant 0 : index
    %c0_4 = arith.constant 0 : index
    %3 = vector.load %arg3[%c0_3, %c0_4] : memref<16x128xf32, #tpu.memory_space<vmem>>, vector<16x128xf32>
    tpu.vector_store %arg3[%c0_3, %c0_4], %2 {strides = array<i32>} : memref<16x128xf32, #tpu.memory_space<vmem>>, vector<16x128xf32>,
    return
  }
  func.func @transform_0(%arg0: i32) -> (i32, i32) {
    %c0_i32 = arith.constant 0 : i32
    %c0_i32_0 = arith.constant 0 : i32
    return %arg0, %c0_i32 : i32, i32
  }
  func.func @transform_1(%arg0: i32) -> (i32, i32) {
    %c0_i32 = arith.constant 0 : i32
    %c0_i32_0 = arith.constant 0 : i32
    %c0_i32_1 = arith.constant 0 : i32
    return %c0_i32, %c0_i32_0 : i32, i32
  }
  func.func @transform_2(%arg0: i32) -> (i32, i32) {
    %c0_i32 = arith.constant 0 : i32
    %c0_i32_0 = arith.constant 0 : i32
    return %arg0, %c0_i32 : i32, i32
  }
}

</mosaic_0001>

<llo_original>
// kernel: tpu_custom_call.1
$region0: #{tpu_custom_call.1}
  #allocation0 [shape = 'u32[]', space=smem, size = 0x4, offset = 0x4, fixed_abs, tag = 'smem constant byte address 0x4 - core index']
  #allocation1 [shape = 'u32[144,128]{1,0:T(1,128)}', space=vmem, size = 0x12000, scoped, tag = 'internal scratch']
  %s0 = inlined_call_operand.hbm [shape: f32[16,32], index: 0, kind: input, shape index: {}]
  %s1 = inlined_call_operand.hbm [shape: f32[32,128], index: 1, kind: input, shape index: {}]
  %s2 = inlined_call_operand.hbm [shape: f32[16,128], index: 2, kind: output, shape index: {}]
  %s3 = sld [smem:[#allocation0]]
  $region26: #{tpu_custom_call.1} parent=0
    _
  %s5 = ssub.s32 1, %s3
  %s6 = scalar_select 0, %s5, %s3
  $region1: #{tpu_custom_call.1} parent=0
    #allocation2 [shape = 'u8[8192]{0}', space=vmem, size = 0x2000, scoped, tag = 'input window, operand 0, single buffered']
    #allocation3 [shape = 's32[1]{0}', space=sflag, size = 0x4, scoped, tag = 'scoped memory for tpu_custom_call.1']
    #allocation4 [shape = 's32[1]{0}', space=sflag, size = 0x4, scoped, tag = 'scoped memory for tpu_custom_call.1']
    #allocation5 [shape = 'u8[16384]{0}', space=vmem, size = 0x4000, scoped, tag = 'input window, operand 1, single buffered']
    #allocation6 [shape = 's32[1]{0}', space=sflag, size = 0x4, scoped, tag = 'scoped memory for tpu_custom_call.1']
    #allocation7 [shape = 'u8[8192]{0}', space=vmem, size = 0x2000, scoped, tag = 'output window, operand 0, single buffered']
    %7 = vsyncpa [#allocation3], 0
    %8 = vsyncpa [#allocation6], 0
    %9 = vsyncpa [#allocation4], 0
    // Predicated region
    $region2: #{tpu_custom_call.1} parent=1 // pred_check
      _
    $region3: #{tpu_custom_call.1} parent=1 // pred_check_branch
      %11 = sbr.rel (0) target = $region5
    $region4: #{tpu_custom_call.1} parent=1 // pred_region
      %s13 = ssub.s32 256, 256
      %14 = vsyncadd [#allocation3], %s13
      %s15 = sshll.u32 [#allocation2], 4
      %s16 = int_to_ptr.vmem [resolvable:$true] %s15
      %21 = dma.hbm_to_vmem [thread:$0]  %s0, 256, %s16, [#allocation3], 128, 128, 8
    $region5: #{tpu_custom_call.1} parent=1 // pred_fallthru
      _
    // Predicated region
    $region6: #{tpu_custom_call.1} parent=1 // pred_check
      _
    $region7: #{tpu_custom_call.1} parent=1 // pred_check_branch
      %23 = sbr.rel (0) target = $region9
    $region8: #{tpu_custom_call.1} parent=1 // pred_region
      %s25 = ssub.s32 512, 512
      %26 = vsyncadd [#allocation6], %s25
      %s27 = sshll.u32 [#allocation5], 4
      %s28 = int_to_ptr.vmem [resolvable:$true] %s27
      %33 = dma.hbm_to_vmem [thread:$0]  %s1, 512, %s28, [#allocation6], 128, 128, 8
    $region9: #{tpu_custom_call.1} parent=1 // pred_fallthru
      _
    // Predicated region
    $region10: #{tpu_custom_call.1} parent=1 // pred_check
      _
    $region11: #{tpu_custom_call.1} parent=1 // pred_check_branch
      %35 = sbr.rel (0) target = $region13
    $region12: #{tpu_custom_call.1} parent=1 // pred_region
      %36 = dma.done [#allocation3], 256
    $region13: #{tpu_custom_call.1} parent=1 // pred_fallthru
      _
    // Predicated region
    $region14: #{tpu_custom_call.1} parent=1 // pred_check
      _
    $region15: #{tpu_custom_call.1} parent=1 // pred_check_branch
      %38 = sbr.rel (0) target = $region17
    $region16: #{tpu_custom_call.1} parent=1 // pred_region
      %39 = dma.done [#allocation6], 512
    $region17: #{tpu_custom_call.1} parent=1 // pred_fallthru
      _
    %v40 = vld [vmem:[#allocation2] sm:$0xff]
    %v41 = vld [vmem:[#allocation2 + $0x8] sm:$0xff]
    %v42 = vld [vmem:[#allocation5] sm:$0xff]
    %v43 = vld [vmem:[#allocation5 + $0x8] sm:$0xff]
    %v44 = vld [vmem:[#allocation5 + $0x10] sm:$0xff]
    %v45 = vld [vmem:[#allocation5 + $0x18] sm:$0xff]
    %vm46 = vcmask 261120
    %v48 = vsel %vm46, %v40, 0
    %v51 = vsel %vm46, %v41, 0
    %53 = vmatprep.subr.mxu0 0.0
    %54 = vmatpush1.msra.mxu0 %v42
    %55 = vmatprep.subr.mxu0 0.0
    %56 = vmatpush1.msra.mxu0 %v43
    %57 = vmatprep.subr.mxu0 0.0
    %58 = vmatpush1.msra.mxu0 %v44
    %59 = vmatprep.subr.mxu0 0.0
    %60 = vmatpush1.msra.mxu0 %v45
    %61 = vmatprep.subr.mxu0 0.0
    %62 = vmatpush1.msra.mxu0 0.0
    %63 = vmatprep.subr.mxu0 0.0
    %64 = vmatpush1.msra.mxu0 0.0
    %65 = vmatprep.subr.mxu0 0.0
    %66 = vmatpush1.msra.mxu0 0.0
    %67 = vmatprep.subr.mxu0 0.0
    %68 = vmatpush1.msra.mxu0 0.0
    %69 = vmatprep.subr.mxu0 0.0
    %70 = vmatpush1.msra.mxu0 0.0
    %71 = vmatprep.subr.mxu0 0.0
    %72 = vmatpush1.msra.mxu0 0.0
    %73 = vmatprep.subr.mxu0 0.0
    %74 = vmatpush1.msra.mxu0 0.0
    %75 = vmatprep.subr.mxu0 0.0
    %76 = vmatpush1.msra.mxu0 0.0
    %77 = vmatprep.subr.mxu0 0.0
    %78 = vmatpush1.msra.mxu0 0.0
    %79 = vmatprep.subr.mxu0 0.0
    %80 = vmatpush1.msra.mxu0 0.0
    %81 = vmatprep.subr.mxu0 0.0
    %82 = vmatpush1.msra.mxu0 0.0
    %83 = vmatprep.subr.mxu0 0.0
    %84 = vmatpush1.msra.mxu0 0.0
    %85 = vmatprep.subr.mxu0 0.0
    %86 = vmatpush1.msra.mxu0 0.0
    %87 = vmatprep.subr.mxu0 0.0
    %88 = vmatpush1.msra.mxu0 0.0
    %89 = vmatprep.subr.mxu0 0.0
    %90 = vmatpush1.msra.mxu0 0.0
    %91 = vmatprep.subr.mxu0 0.0
    %92 = vmatpush1.msra.mxu0 0.0
    %93 = vmatprep.subr.mxu0 0.0
    %94 = vmatpush1.msra.mxu0 0.0
    %95 = vmatprep.subr.mxu0 0.0
    %96 = vmatpush1.msra.mxu0 0.0
    %97 = vmatprep.subr.mxu0 0.0
    %98 = vmatpush1.msra.mxu0 0.0
    %99 = vmatprep.subr.mxu0 0.0
    %100 = vmatpush1.msra.mxu0 0.0
    %101 = vmatprep.subr.mxu0 0.0
    %102 = vmatpush1.msra.mxu0 0.0
    %103 = vmatprep.subr.mxu0 0.0
    %104 = vmatpush1.msra.mxu0 0.0
    %105 = vmatprep.subr.mxu0 0.0
    %106 = vmatpush1.msra.mxu0 0.0
    %107 = vmatprep.subr.mxu0 0.0
    %108 = vmatpush1.msra.mxu0 0.0
    %109 = vmatprep.subr.mxu0 0.0
    %110 = vmatpush1.msra.mxu0 0.0
    %111 = vmatprep.subr.mxu0 0.0
    %112 = vmatpush1.msra.mxu0 0.0
    %113 = vmatprep.subr.mxu0 0.0
    %114 = vmatpush1.msra.mxu0 0.0
    %115 = vmatprep.subr.mxu0 0.0
    %116 = vmatpush1.msra.mxu0 0.0
    %117 = vmatprep.mubr.f32.mxu0 0.0
    %118 = vmatmul.mubr.f32.gmra.mrb[0].mxu0 %v48
    %v119 = vpop.f32.mrb[0].mxu0
    %v120 = vadd.f32 0.0, %v119
    %v121 = vpop.f32.mrb[0].mxu0
    %122 = vmatprep.mubr.f32.mxu0 0.0
    %123 = vmatmul.mubr.f32.gmra.mrb[0].mxu0 %v51
    %v124 = vpop.f32.mrb[0].mxu0
    %v125 = vadd.f32 0.0, %v124
    %v126 = vpop.f32.mrb[0].mxu0
    %127 = vdwg.mxu0
    %128 = vst [vmem:[#allocation7] sm:$0xff] %v120
    %129 = vst [vmem:[#allocation7 + $0x8] sm:$0xff] %v125
    // Predicated region
    $region18: #{tpu_custom_call.1} parent=1 // pred_check
      _
    $region19: #{tpu_custom_call.1} parent=1 // pred_check_branch
      %131 = sbr.rel (0) target = $region21
    $region20: #{tpu_custom_call.1} parent=1 // pred_region
      %s133 = ssub.s32 256, 256
      %134 = vsyncadd [#allocation4], %s133
      %s135 = sshll.u32 [#allocation7], 4
      %s136 = int_to_ptr.vmem [resolvable:$true] %s135
      %141 = dma.vmem_to_hbm [thread:$0]  %s136, 256, %s2, [#allocation4], 128, 128, 8
    $region21: #{tpu_custom_call.1} parent=1 // pred_fallthru
      _
    // Predicated region
    $region22: #{tpu_custom_call.1} parent=1 // pred_check
      _
    $region23: #{tpu_custom_call.1} parent=1 // pred_check_branch
      %143 = sbr.rel (0) target = $region25
    $region24: #{tpu_custom_call.1} parent=1 // pred_region
      %144 = dma.done [#allocation4], 256
    $region25: #{tpu_custom_call.1} parent=1 // pred_fallthru
      _
    %145 = vsyncpa [#allocation3], 1
    %146 = vsyncpa [#allocation6], 1
    %147 = vsyncpa [#allocation4], 1

</llo_original>
